<compile_context>
chip_gen: v6e
topology: v6e:2x2x1
jax: 0.10.0
libtpu: 0.0.40
codegen_flags: <defaults>
</compile_context>

<pallas_src>
import jax
import jax.numpy as jnp
from jax.experimental import pallas as pl
from jax.experimental.pallas import tpu as pltpu


def mlstm_scan_kernel(x_ref, w_ref, b_ref, c0_ref, n0_ref, m0_ref,
                      h_ref, c_ref, n_ref, m_ref):
    t = pl.program_id(1)
    H = c_ref.shape[-1]

    # Initialize the VMEM-resident recurrent state from the incoming state at t == 0.
    @pl.when(t == 0)
    def _init():
        c_ref[...] = c0_ref[...]
        n_ref[...] = n0_ref[...]
        m_ref[...] = m0_ref[...]

    # ---- fused projections: one bf16 MXU matmul with a shared LHS ----
    x = x_ref[0].astype(jnp.bfloat16)                                   # (TB, Din)
    proj = jnp.dot(x, w_ref[...], preferred_element_type=jnp.float32)   # (TB, Wtot) f32
    proj = proj + b_ref[...]

    q = proj[:, 0 * H:1 * H]                                            # (TB, H)
    k = proj[:, 1 * H:2 * H] * (H ** -0.5)                              # (TB, H)
    v = proj[:, 2 * H:3 * H]                                            # (TB, H)
    o = jax.nn.sigmoid(proj[:, 3 * H:4 * H])                            # (TB, H)
    i_tilde = proj[:, 4 * H:4 * H + 1]                                  # (TB, 1)
    f_tilde = proj[:, 4 * H + 1:4 * H + 2]                              # (TB, 1)

    # ---- scalar gates in log space (all f32) ----
    m_prev = m_ref[...]                                                 # (TB, 1)
    n_prev = n_ref[...]                                                 # (TB, H)
    c_prev = c_ref[...]                                                 # (TB, H, H)

    m_new = jnp.maximum(f_tilde + m_prev, i_tilde)
    i_g = jnp.exp(i_tilde - m_new)                                      # (TB, 1)
    f_g = jnp.exp(f_tilde + m_prev - m_new)                             # (TB, 1)

    # ---- readout via the rank-1 identity: C_t q = f*(C_{t-1} q) + i*v*(k.q) ----
    cq = jnp.sum(c_prev * q[:, None, :], axis=-1)                       # (TB, H)
    kq = jnp.sum(k * q, axis=-1, keepdims=True)                         # (TB, 1)
    n_new = f_g * n_prev + i_g * k                                      # (TB, H)
    h_num = f_g * cq + (i_g * kq) * v                                   # (TB, H)
    denom = jnp.maximum(jnp.abs(jnp.sum(n_new * q, axis=-1, keepdims=True)),
                        jnp.float32(1.0))                               # (TB, 1)
    h_ref[0] = (o * h_num) * pl.reciprocal(denom, approx=True)

    # ---- state update (C_t tile is store-only; gate broadcasts hoisted) ----
    f_g3 = f_g[:, :, None]
    i_g3 = i_g[:, :, None]
    c_ref[...] = f_g3 * c_prev + (i_g3 * v[:, :, None]) * k[:, None, :]
    n_ref[...] = n_new
    m_ref[...] = m_new


def _round_up(x, m):
    return ((x + m - 1) // m) * m


def _pick_block_b(batch, hidden, budget_bytes=8 * 1024 * 1024):
    # ~4 resident copies of the (TB, H, H) f32 state tile (aliased in+out blocks,
    # pipelined).  Conservative so the same tile also fits v7x's smaller scoped VMEM.
    cap = max(1, budget_bytes // max(1, 4 * hidden * hidden * 4))
    tb = min(batch, cap)
    while batch % tb:
        tb -= 1
    return tb


def init_params(key, input_size, hidden_size):
    ks = jax.random.split(key, 6)
    scale = 1.0 / jnp.sqrt(jnp.float32(input_size))
    return {
        "wq": jax.random.normal(ks[0], (input_size, hidden_size), jnp.float32) * scale,
        "wk": jax.random.normal(ks[1], (input_size, hidden_size), jnp.float32) * scale,
        "wv": jax.random.normal(ks[2], (input_size, hidden_size), jnp.float32) * scale,
        "wo": jax.random.normal(ks[3], (input_size, hidden_size), jnp.float32) * scale,
        "bo": jnp.zeros((1, hidden_size), jnp.float32),
        "wif": jax.random.normal(ks[4], (input_size, 2), jnp.float32) * scale,
        "bif": jnp.zeros((1, 2), jnp.float32),
    }


def fuse_params(params):
    """Concatenate Wq|Wk|Wv|Wo|Wif into one (Din, Wtot) bf16 weight + f32 bias.

    Column layout: [0:H)=Wq, [H:2H)=Wk, [2H:3H)=Wv, [3H:4H)=Wo, [4H:4H+2)=Wif,
    padded with zeros up to a multiple of 128 lanes.
    """
    wq, wk, wv, wo = params["wq"], params["wk"], params["wv"], params["wo"]
    wif, bo, bif = params["wif"], params["bo"], params["bif"]
    din, h = wq.shape
    wtot = _round_up(4 * h + 2, 128)
    w = jnp.zeros((din, wtot), jnp.float32)
    w = w.at[:, 0 * h:1 * h].set(wq)
    w = w.at[:, 1 * h:2 * h].set(wk)
    w = w.at[:, 2 * h:3 * h].set(wv)
    w = w.at[:, 3 * h:4 * h].set(wo)
    w = w.at[:, 4 * h:4 * h + 2].set(wif)
    b = jnp.zeros((1, wtot), jnp.float32)
    b = b.at[:, 3 * h:4 * h].set(bo)
    b = b.at[:, 4 * h:4 * h + 2].set(bif)
    return {"w_fused": w.astype(jnp.bfloat16), "b_fused": b, "hidden_size": h}


def mlstm_scan(x_seq, fused, state, *, block_b=None,
               vmem_limit_bytes=64 * 1024 * 1024):
    """Run the mLSTM cell over a whole sequence in one fused Pallas kernel.

    x_seq: (T, B, Din) f32
    fused: dict from fuse_params()
    state: (C (B,H,H), n (B,H), m (B,1)) f32
    returns: h_seq (T, B, H) f32, (C_T, n_T, m_T)
    """
    c0, n0, m0 = state
    T, B, Din = x_seq.shape
    H = fused["hidden_size"]
    w, b = fused["w_fused"], fused["b_fused"]
    Wtot = w.shape[1]

    if block_b is None:
        block_b = _pick_block_b(B, H)
    assert B % block_b == 0
    grid = (B // block_b, T)            # batch tiles (parallel/megacore), time (sequential)

    in_specs = [
        pl.BlockSpec((1, block_b, Din), lambda bb, tt: (tt, bb, 0)),    # x_t
        pl.BlockSpec((Din, Wtot), lambda bb, tt: (0, 0)),               # fused W (bf16)
        pl.BlockSpec((1, Wtot), lambda bb, tt: (0, 0)),                 # fused bias (f32)
        pl.BlockSpec((block_b, H, H), lambda bb, tt: (bb, 0, 0)),       # C_0
        pl.BlockSpec((block_b, H), lambda bb, tt: (bb, 0)),             # n_0
        pl.BlockSpec((block_b, 1), lambda bb, tt: (bb, 0)),             # m_0
    ]
    out_specs = (
        pl.BlockSpec((1, block_b, H), lambda bb, tt: (tt, bb, 0)),      # h_t
        pl.BlockSpec((block_b, H, H), lambda bb, tt: (bb, 0, 0)),       # C (VMEM-resident)
        pl.BlockSpec((block_b, H), lambda bb, tt: (bb, 0)),             # n (VMEM-resident)
        pl.BlockSpec((block_b, 1), lambda bb, tt: (bb, 0)),             # m (VMEM-resident)
    )
    out_shape = (
        jax.ShapeDtypeStruct((T, B, H), jnp.float32),
        jax.ShapeDtypeStruct((B, H, H), jnp.float32),
        jax.ShapeDtypeStruct((B, H), jnp.float32),
        jax.ShapeDtypeStruct((B, 1), jnp.float32),
    )

    h_seq, c_new, n_new, m_new = pl.pallas_call(
        mlstm_scan_kernel,
        grid=grid,
        in_specs=in_specs,
        out_specs=out_specs,
        out_shape=out_shape,
        # Update the recurrent state in place: C0->C_T, n0->n_T, m0->m_T.
        input_output_aliases={3: 1, 4: 2, 5: 3},
        compiler_params=pltpu.CompilerParams(
            dimension_semantics=("parallel", "arbitrary"),
            vmem_limit_bytes=vmem_limit_bytes,
        ),
    )(x_seq, w, b, c0, n0, m0)
    return h_seq, (c_new, n_new, m_new)


def mlstm_cell(x, fused, state):
    """Single-step interface matching the original nn.Module cell (x: (B, Din))."""
    h_seq, new_state = mlstm_scan(x[None], fused, state)
    return h_seq[0], new_state


def mlstm_reference(x_seq, fused, state):
    """Pure-JAX reference with identical bf16 projection numerics."""
    w, b, H = fused["w_fused"], fused["b_fused"], fused["hidden_size"]
    c, n, m = state
    hs = []
    for t in range(x_seq.shape[0]):
        x = x_seq[t].astype(jnp.bfloat16)
        proj = jnp.dot(x, w, preferred_element_type=jnp.float32) + b
        q = proj[:, 0:H]
        k = proj[:, H:2 * H] * (H ** -0.5)
        v = proj[:, 2 * H:3 * H]
        o = jax.nn.sigmoid(proj[:, 3 * H:4 * H])
        i_t = proj[:, 4 * H:4 * H + 1]
        f_t = proj[:, 4 * H + 1:4 * H + 2]
        m_new = jnp.maximum(f_t + m, i_t)
        i_g = jnp.exp(i_t - m_new)
        f_g = jnp.exp(f_t + m - m_new)
        c = f_g[:, :, None] * c + i_g[:, :, None] * (v[:, :, None] * k[:, None, :])
        n = f_g * n + i_g * k
        num = jnp.sum(c * q[:, None, :], axis=-1)
        den = jnp.maximum(jnp.abs(jnp.sum(n * q, axis=-1, keepdims=True)), 1.0)
        hs.append(o * num / den)
        m = m_new
    return jnp.stack(hs), (c, n, m)


if __name__ == "__main__":
    # Small demo shapes (production wants H % 128 == 0 and batch tile % 8 == 0).
    T, B, D_IN, H = 8, 2, 16, 32
    key = jax.random.PRNGKey(0)
    k_param, k_x = jax.random.split(key)

    params = init_params(k_param, D_IN, H)
    fused = fuse_params(params)
    x_seq = jax.random.normal(k_x, (T, B, D_IN), jnp.float32)
    state0 = (
        jnp.zeros((B, H, H), jnp.float32),   # C_0
        jnp.zeros((B, H), jnp.float32),      # n_0
        jnp.zeros((B, 1), jnp.float32),      # m_0
    )

    # Compute the reference before the kernel call (the kernel aliases state in place).
    h_exp, (c_exp, n_exp, m_exp) = mlstm_reference(x_seq, fused, state0)

    h_seq, (c_new, n_new, m_new) = mlstm_scan(x_seq, fused, state0)
    jax.block_until_ready((h_seq, c_new, n_new, m_new))

    assert h_seq.shape == (T, B, H) and c_new.shape == (B, H, H)
    assert n_new.shape == (B, H) and m_new.shape == (B, 1)
    assert bool(jnp.all(jnp.isfinite(h_seq)))
    assert bool(jnp.allclose(h_seq, h_exp, rtol=2e-2, atol=2e-2))
    assert bool(jnp.allclose(c_new, c_exp, rtol=2e-2, atol=2e-2))
    assert bool(jnp.allclose(n_new, n_exp, rtol=2e-2, atol=2e-2))
    assert bool(jnp.allclose(m_new, m_exp, rtol=2e-2, atol=2e-2))
    print("KERNEL_OK")
</pallas_src>

<mosaic_0001>
module attributes {stable_mosaic.version = 11 : i64} {
  func.func @mlstm_scan_kernel(%arg0: i32, %arg1: i32, %arg2: memref<1x2x16xf32, #tpu.memory_space<vmem>>, %arg3: memref<16x256xbf16, #tpu.memory_space<vmem>>, %arg4: memref<1x256xf32, #tpu.memory_space<vmem>>, %arg5: memref<2x32x32xf32, #tpu.memory_space<vmem>>, %arg6: memref<2x32xf32, #tpu.memory_space<vmem>>, %arg7: memref<2x1xf32, #tpu.memory_space<vmem>>, %arg8: memref<1x2x32xf32, #tpu.memory_space<vmem>>, %arg9: memref<2x32x32xf32, #tpu.memory_space<vmem>>, %arg10: memref<2x32xf32, #tpu.memory_space<vmem>>, %arg11: memref<2x1xf32, #tpu.memory_space<vmem>>) attributes {dimension_semantics = [#tpu.dimension_semantics<parallel>, #tpu.dimension_semantics<arbitrary>], iteration_bounds = array<i64: 1, 8>, scalar_prefetch = 0 : i64, scratch_operands = 0 : i64, tpu.core_type = #tpu.core_type<tc>, window_params = [{transform_indices = @transform_0, window_bounds = array<i64: 1, 2, 16>}, {pipeline_mode = #tpu.pipeline_mode<synchronous>, transform_indices = @transform_1, window_bounds = array<i64: 16, 256>}, {pipeline_mode = #tpu.pipeline_mode<synchronous>, transform_indices = @transform_2, window_bounds = array<i64: 1, 256>}, {transform_indices = @transform_3, window_bounds = array<i64: 2, 32, 32>}, {transform_indices = @transform_4, window_bounds = array<i64: 2, 32>}, {transform_indices = @transform_5, window_bounds = array<i64: 2, 1>}, {transform_indices = @transform_6, window_bounds = array<i64: 1, 2, 32>}, {transform_indices = @transform_7, window_bounds = array<i64: 2, 32, 32>}, {transform_indices = @transform_8, window_bounds = array<i64: 2, 32>}, {transform_indices = @transform_9, window_bounds = array<i64: 2, 1>}]} {
    %c0_i32 = arith.constant 0 : i32
    %0 = arith.cmpi eq, %arg1, %c0_i32 : i32
    %1 = arith.extui %0 : i1 to i32
    %c0_i32_0 = arith.constant 0 : i32
    %2 = arith.cmpi ne, %1, %c0_i32_0 : i32
    scf.if %2 {
      %c0_30 = arith.constant 0 : index
      %c0_31 = arith.constant 0 : index
      %c0_32 = arith.constant 0 : index
      %80 = vector.load %arg5[%c0_30, %c0_31, %c0_32] : memref<2x32x32xf32, #tpu.memory_space<vmem>>, vector<2x32x32xf32>
      %c0_33 = arith.constant 0 : index
      %c0_34 = arith.constant 0 : index
      %c0_35 = arith.constant 0 : index
      %81 = vector.load %arg9[%c0_33, %c0_34, %c0_35] : memref<2x32x32xf32, #tpu.memory_space<vmem>>, vector<2x32x32xf32>
      tpu.vector_store %arg9[%c0_33, %c0_34, %c0_35], %80 {strides = array<i32>} : memref<2x32x32xf32, #tpu.memory_space<vmem>>, vector<2x32x32xf32>,
      %c0_36 = arith.constant 0 : index
      %c0_37 = arith.constant 0 : index
      %82 = vector.load %arg6[%c0_36, %c0_37] : memref<2x32xf32, #tpu.memory_space<vmem>>, vector<2x32xf32>
      %c0_38 = arith.constant 0 : index
      %c0_39 = arith.constant 0 : index
      %83 = vector.load %arg10[%c0_38, %c0_39] : memref<2x32xf32, #tpu.memory_space<vmem>>, vector<2x32xf32>
      tpu.vector_store %arg10[%c0_38, %c0_39], %82 {strides = array<i32>} : memref<2x32xf32, #tpu.memory_space<vmem>>, vector<2x32xf32>,
      %c0_40 = arith.constant 0 : index
      %c0_41 = arith.constant 0 : index
      %84 = vector.load %arg7[%c0_40, %c0_41] : memref<2x1xf32, #tpu.memory_space<vmem>>, vector<2x1xf32>
      %c0_42 = arith.constant 0 : index
      %c0_43 = arith.constant 0 : index
      %85 = vector.load %arg11[%c0_42, %c0_43] : memref<2x1xf32, #tpu.memory_space<vmem>>, vector<2x1xf32>
      tpu.vector_store %arg11[%c0_42, %c0_43], %84 {strides = array<i32>} : memref<2x1xf32, #tpu.memory_space<vmem>>, vector<2x1xf32>,
    } else {
    }
    %c0 = arith.constant 0 : index
    %c0_1 = arith.constant 0 : index
    %c0_2 = arith.constant 0 : index
    %3 = vector.load %arg2[%c0, %c0_1, %c0_2] : memref<1x2x16xf32, #tpu.memory_space<vmem>>, vector<1x2x16xf32>
    %4 = vector.shape_cast %3 : vector<1x2x16xf32> to vector<2x16xf32>
    %5 = arith.truncf %4 : vector<2x16xf32> to vector<2x16xbf16>
    %c0_3 = arith.constant 0 : index
    %c0_4 = arith.constant 0 : index
    %6 = vector.load %arg3[%c0_3, %c0_4] : memref<16x256xbf16, #tpu.memory_space<vmem>>, vector<16x256xbf16>
    %cst = arith.constant dense<0.000000e+00> : vector<2x256xf32>
    %7 = tpu.matmul %5, %6, %cst {dimension_numbers = #tpu.dot_dimension_numbers<[1], [0], [0], [1], [0, 0, 1, 1], [], []>} : vector<2x16xbf16>, vector<16x256xbf16>, vector<2x256xf32> -> vector<2x256xf32>
    %c0_5 = arith.constant 0 : index
    %c0_6 = arith.constant 0 : index
    %8 = vector.load %arg4[%c0_5, %c0_6] : memref<1x256xf32, #tpu.memory_space<vmem>>, vector<1x256xf32>
    %9 = vector.broadcast %8 : vector<1x256xf32> to vector<2x256xf32>
    %10 = arith.addf %7, %9 : vector<2x256xf32>
    %11 = vector.extract_strided_slice %10 {offsets = [0, 0], sizes = [2, 32], strides = [1, 1]} : vector<2x256xf32> to vector<2x32xf32>
    %12 = vector.extract_strided_slice %10 {offsets = [0, 32], sizes = [2, 32], strides = [1, 1]} : vector<2x256xf32> to vector<2x32xf32>
    %cst_7 = arith.constant 0.176776692 : f32
    %13 = vector.broadcast %cst_7 : f32 to vector<2x32xf32>
    %14 = arith.mulf %12, %13 : vector<2x32xf32>
    %15 = vector.extract_strided_slice %10 {offsets = [0, 64], sizes = [2, 32], strides = [1, 1]} : vector<2x256xf32> to vector<2x32xf32>
    %16 = vector.extract_strided_slice %10 {offsets = [0, 96], sizes = [2, 32], strides = [1, 1]} : vector<2x256xf32> to vector<2x32xf32>
    %17 = arith.negf %16 : vector<2x32xf32>
    %18 = math.exp %17 : vector<2x32xf32>
    %cst_8 = arith.constant 1.000000e+00 : f32
    %19 = vector.broadcast %cst_8 : f32 to vector<2x32xf32>
    %20 = arith.addf %19, %18 : vector<2x32xf32>
    %21 = arith.divf %19, %20 : vector<2x32xf32>
    %22 = vector.extract_strided_slice %10 {offsets = [0, 128], sizes = [2, 1], strides = [1, 1]} : vector<2x256xf32> to vector<2x1xf32>
    %23 = vector.extract_strided_slice %10 {offsets = [0, 129], sizes = [2, 1], strides = [1, 1]} : vector<2x256xf32> to vector<2x1xf32>
    %c0_9 = arith.constant 0 : index
    %c0_10 = arith.constant 0 : index
    %24 = vector.load %arg11[%c0_9, %c0_10] : memref<2x1xf32, #tpu.memory_space<vmem>>, vector<2x1xf32>
    %c0_11 = arith.constant 0 : index
    %c0_12 = arith.constant 0 : index
    %25 = vector.load %arg10[%c0_11, %c0_12] : memref<2x32xf32, #tpu.memory_space<vmem>>, vector<2x32xf32>
    %c0_13 = arith.constant 0 : index
    %c0_14 = arith.constant 0 : index
    %c0_15 = arith.constant 0 : index
    %26 = vector.load %arg9[%c0_13, %c0_14, %c0_15] : memref<2x32x32xf32, #tpu.memory_space<vmem>>, vector<2x32x32xf32>
    %27 = arith.addf %23, %24 : vector<2x1xf32>
    %28 = arith.maximumf %27, %22 : vector<2x1xf32>
    %29 = arith.subf %22, %28 : vector<2x1xf32>
    %30 = math.exp %29 : vector<2x1xf32>
    %31 = arith.addf %23, %24 : vector<2x1xf32>
    %32 = arith.subf %31, %28 : vector<2x1xf32>
    %33 = math.exp %32 : vector<2x1xf32>
    %34 = vector.shape_cast %11 : vector<2x32xf32> to vector<2x1x32xf32>
    %35 = vector.broadcast %34 : vector<2x1x32xf32> to vector<2x32x32xf32>
    %36 = arith.mulf %26, %35 : vector<2x32x32xf32>
    %cst_16 = arith.constant dense<0.000000e+00> : vector<2x32xf32>
    %37 = vector.multi_reduction <add>, %36, %cst_16 [2] : vector<2x32x32xf32> to vector<2x32xf32>
    %38 = arith.mulf %14, %11 : vector<2x32xf32>
    %cst_17 = arith.constant dense<0.000000e+00> : vector<2xf32>
    %39 = vector.multi_reduction <add>, %38, %cst_17 [1] : vector<2x32xf32> to vector<2xf32>
    %40 = vector.shape_cast %39 : vector<2xf32> to vector<2x1xf32>
    %41 = vector.broadcast %33 : vector<2x1xf32> to vector<2x32xf32>
    %42 = arith.mulf %41, %25 : vector<2x32xf32>
    %43 = vector.broadcast %30 : vector<2x1xf32> to vector<2x32xf32>
    %44 = arith.mulf %43, %14 : vector<2x32xf32>
    %45 = arith.addf %42, %44 : vector<2x32xf32>
    %46 = vector.broadcast %33 : vector<2x1xf32> to vector<2x32xf32>
    %47 = arith.mulf %46, %37 : vector<2x32xf32>
    %48 = arith.mulf %30, %40 : vector<2x1xf32>
    %49 = vector.broadcast %48 : vector<2x1xf32> to vector<2x32xf32>
    %50 = arith.mulf %49, %15 : vector<2x32xf32>
    %51 = arith.addf %47, %50 : vector<2x32xf32>
    %52 = arith.mulf %45, %11 : vector<2x32xf32>
    %cst_18 = arith.constant dense<0.000000e+00> : vector<2xf32>
    %53 = vector.multi_reduction <add>, %52, %cst_18 [1] : vector<2x32xf32> to vector<2xf32>
    %54 = vector.shape_cast %53 : vector<2xf32> to vector<2x1xf32>
    %55 = math.absf %54 : vector<2x1xf32>
    %cst_19 = arith.constant 1.000000e+00 : f32
    %56 = vector.broadcast %cst_19 : f32 to vector<2x1xf32>
    %57 = arith.maximumf %55, %56 : vector<2x1xf32>
    %58 = arith.mulf %21, %51 : vector<2x32xf32>
    %59 = tpu.reciprocal %57 {approx = true} : vector<2x1xf32> -> vector<2x1xf32>
    %60 = vector.broadcast %59 : vector<2x1xf32> to vector<2x32xf32>
    %61 = arith.mulf %58, %60 : vector<2x32xf32>
    %c0_20 = arith.constant 0 : index
    %c0_21 = arith.constant 0 : index
    %c0_22 = arith.constant 0 : index
    %62 = vector.load %arg8[%c0_20, %c0_21, %c0_22] : memref<1x2x32xf32, #tpu.memory_space<vmem>>, vector<1x2x32xf32>
    %63 = vector.shape_cast %62 : vector<1x2x32xf32> to vector<2x32xf32>
    %64 = vector.shape_cast %61 : vector<2x32xf32> to vector<1x2x32xf32>
    tpu.vector_store %arg8[%c0_20, %c0_21, %c0_22], %64 {strides = array<i32>} : memref<1x2x32xf32, #tpu.memory_space<vmem>>, vector<1x2x32xf32>,
    %65 = vector.shape_cast %33 : vector<2x1xf32> to vector<2x1x1xf32>
    %66 = vector.shape_cast %30 : vector<2x1xf32> to vector<2x1x1xf32>
    %67 = vector.broadcast %65 : vector<2x1x1xf32> to vector<2x32x32xf32>
    %68 = arith.mulf %67, %26 : vector<2x32x32xf32>
    %69 = vector.shape_cast %15 : vector<2x32xf32> to vector<2x32x1xf32>
    %70 = vector.broadcast %66 : vector<2x1x1xf32> to vector<2x32x1xf32>
    %71 = arith.mulf %70, %69 : vector<2x32x1xf32>
    %72 = vector.shape_cast %14 : vector<2x32xf32> to vector<2x1x32xf32>
    %73 = vector.broadcast %71 : vector<2x32x1xf32> to vector<2x32x32xf32>
    %74 = vector.broadcast %72 : vector<2x1x32xf32> to vector<2x32x32xf32>
    %75 = arith.mulf %73, %74 : vector<2x32x32xf32>
    %76 = arith.addf %68, %75 : vector<2x32x32xf32>
    %c0_23 = arith.constant 0 : index
    %c0_24 = arith.constant 0 : index
    %c0_25 = arith.constant 0 : index
    %77 = vector.load %arg9[%c0_23, %c0_24, %c0_25] : memref<2x32x32xf32, #tpu.memory_space<vmem>>, vector<2x32x32xf32>
    tpu.vector_store %arg9[%c0_23, %c0_24, %c0_25], %76 {strides = array<i32>} : memref<2x32x32xf32, #tpu.memory_space<vmem>>, vector<2x32x32xf32>,
    %c0_26 = arith.constant 0 : index
    %c0_27 = arith.constant 0 : index
    %78 = vector.load %arg10[%c0_26, %c0_27] : memref<2x32xf32, #tpu.memory_space<vmem>>, vector<2x32xf32>
    tpu.vector_store %arg10[%c0_26, %c0_27], %45 {strides = array<i32>} : memref<2x32xf32, #tpu.memory_space<vmem>>, vector<2x32xf32>,
    %c0_28 = arith.constant 0 : index
    %c0_29 = arith.constant 0 : index
    %79 = vector.load %arg11[%c0_28, %c0_29] : memref<2x1xf32, #tpu.memory_space<vmem>>, vector<2x1xf32>
    tpu.vector_store %arg11[%c0_28, %c0_29], %28 {strides = array<i32>} : memref<2x1xf32, #tpu.memory_space<vmem>>, vector<2x1xf32>,
    return
  }
  func.func @transform_0(%arg0: i32, %arg1: i32) -> (i32, i32, i32) {
    %c0_i32 = arith.constant 0 : i32
    %c0_i32_0 = arith.constant 0 : i32
    return %arg1, %arg0, %c0_i32 : i32, i32, i32
  }
  func.func @transform_1(%arg0: i32, %arg1: i32) -> (i32, i32) {
    %c0_i32 = arith.constant 0 : i32
    %c0_i32_0 = arith.constant 0 : i32
    %c0_i32_1 = arith.constant 0 : i32
    return %c0_i32, %c0_i32_0 : i32, i32
  }
  func.func @transform_2(%arg0: i32, %arg1: i32) -> (i32, i32) {
    %c0_i32 = arith.constant 0 : i32
    %c0_i32_0 = arith.constant 0 : i32
    %c0_i32_1 = arith.constant 0 : i32
    return %c0_i32, %c0_i32_0 : i32, i32
  }
  func.func @transform_3(%arg0: i32, %arg1: i32) -> (i32, i32, i32) {
    %c0_i32 = arith.constant 0 : i32
    %c0_i32_0 = arith.constant 0 : i32
    %c0_i32_1 = arith.constant 0 : i32
    return %arg0, %c0_i32, %c0_i32_0 : i32, i32, i32
  }
  func.func @transform_4(%arg0: i32, %arg1: i32) -> (i32, i32) {
    %c0_i32 = arith.constant 0 : i32
    %c0_i32_0 = arith.constant 0 : i32
    return %arg0, %c0_i32 : i32, i32
  }
  func.func @transform_5(%arg0: i32, %arg1: i32) -> (i32, i32) {
    %c0_i32 = arith.constant 0 : i32
    %c0_i32_0 = arith.constant 0 : i32
    return %arg0, %c0_i32 : i32, i32
  }
  func.func @transform_6(%arg0: i32, %arg1: i32) -> (i32, i32, i32) {
    %c0_i32 = arith.constant 0 : i32
    %c0_i32_0 = arith.constant 0 : i32
    return %arg1, %arg0, %c0_i32 : i32, i32, i32
  }
  func.func @transform_7(%arg0: i32, %arg1: i32) -> (i32, i32, i32) {
    %c0_i32 = arith.constant 0 : i32
    %c0_i32_0 = arith.constant 0 : i32
    %c0_i32_1 = arith.constant 0 : i32
    return %arg0, %c0_i32, %c0_i32_0 : i32, i32, i32
  }
  func.func @transform_8(%arg0: i32, %arg1: i32) -> (i32, i32) {
    %c0_i32 = arith.constant 0 : i32
    %c0_i32_0 = arith.constant 0 : i32
    return %arg0, %c0_i32 : i32, i32
  }
  func.func @transform_9(%arg0: i32, %arg1: i32) -> (i32, i32) {
    %c0_i32 = arith.constant 0 : i32
    %c0_i32_0 = arith.constant 0 : i32
    return %arg0, %c0_i32 : i32, i32
  }
}

</mosaic_0001>

<llo_original>
// kernel: tpu_custom_call.1
$region0: #{tpu_custom_call.1}
  #allocation0 [shape = 'u32[]', space=smem, size = 0x4, offset = 0x4, fixed_abs, tag = 'smem constant byte address 0x4 - core index']
  #allocation1 [shape = 'u32[144,128]{1,0:T(1,128)}', space=vmem, size = 0x12000, scoped, tag = 'internal scratch']
  %s0 = inlined_call_operand.vmem [shape: f32[8,2,16], index: 0, kind: input, shape index: {}]
  %s1 = inlined_call_operand.vmem [shape: bf16[16,256], index: 1, kind: input, shape index: {}]
  %s2 = inlined_call_operand.vmem [shape: f32[1,256], index: 2, kind: input, shape index: {}]
  %s3 = inlined_call_operand.vmem [shape: f32[2,32,32], index: 3, kind: input, shape index: {}, may-alias: {3,7}]
  %s4 = inlined_call_operand.vmem [shape: f32[2,32], index: 4, kind: input, shape index: {}, may-alias: {4,8}]
  %s5 = inlined_call_operand.vmem [shape: f32[2,1], index: 5, kind: input, shape index: {}, may-alias: {5,9}]
  %s6 = inlined_call_operand.hbm [shape: f32[8,2,32], index: 6, kind: output, shape index: {0}]
  %s7 = inlined_call_operand.vmem [shape: f32[2,32,32], index: 7, kind: output, shape index: {1}, may-alias: {3,7}]
  %s8 = inlined_call_operand.vmem [shape: f32[2,32], index: 8, kind: output, shape index: {2}, may-alias: {4,8}]
  %s9 = inlined_call_operand.vmem [shape: f32[2,1], index: 9, kind: output, shape index: {3}, may-alias: {5,9}]
  %10 = xla_tuple %s6, %s7, %s8, %s9
  %s11 = sld [smem:[#allocation0]]
  $region85: #{tpu_custom_call.1} parent=0
    _
  %s13 = ssub.s32 1, %s11
  %s14 = scalar_select 0, %s13, %s11
  $region1: #{tpu_custom_call.1} parent=0
    #allocation2 [shape = 'u8[2048]{0}', space=vmem, size = 0x800, scoped, tag = 'output window, operand 0']
    #allocation3 [shape = 's32[2]{0}', space=sflag, size = 0x8, scoped, tag = 'scoped memory for tpu_custom_call.1']
    %15 = vsyncpa [#allocation3], 0
    %s16 = scalar_lea.sflag [#allocation3], 1
    %17 = vsyncpa %s16, 0
    loop: start=0, step=1, limit=10
    $region2: #{tpu_custom_call.1} parent=1 // loop_pre_header
      _
    $region3: #{tpu_custom_call.1} parent=1 // loop_header
      %s19 = sphi 0, %s23
      %p20 = scmp.ge.s32.totalorder %s19, 10
      %s26 = sphi 0, %s38
      %s27 = sphi 0, %s34
      %s28 = sphi 0, %s26
      %s29 = sphi 0, %s27
      %s30 = sphi 0, %s28
      %s31 = sphi 0, %s29
      %s43 = sphi 0, %s45
      %s46 = sphi 0, %s43
      %s47 = sphi 0, %s46
      %s63 = sphi 0, %s47
      %s67 = sphi 0, %s67
      %s69 = sphi 0, %s67
      %s70 = sphi 0, %s69
      %s84 = sphi 0, %s70
      %s88 = sphi 0, %s88
      %s90 = sphi 0, %s88
      %s91 = sphi 0, %s90
      %s105 = sphi 0, %s91
      %s111 = sphi 0, %s113
      %s114 = sphi 0, %s111
      %s115 = sphi 0, %s114
      %s131 = sphi 0, %s115
      %s137 = sphi 0, %s139
      %s140 = sphi 0, %s137
      %s141 = sphi 0, %s140
      %s157 = sphi 0, %s141
      %s163 = sphi 0, %s165
      %s166 = sphi 0, %s163
      %s167 = sphi 0, %s166
      %s183 = sphi 0, %s167
      %s191 = sphi 0, %s193
      %s194 = sphi 0, %s191
      %s195 = sphi 0, %s194
      %s211 = sphi 0, %s195
      %s217 = sphi 0, %s219
      %s220 = sphi 0, %s217
      %s221 = sphi 0, %s220
      %s237 = sphi 0, %s221
      %s243 = sphi 0, %s245
      %s246 = sphi 0, %s243
      %s247 = sphi 0, %s246
      %s263 = sphi 0, %s247
      %s269 = sphi 0, %s271
      %s272 = sphi 0, %s269
      %s273 = sphi 0, %s272
      %s289 = sphi 0, %s273
    $region4: #{tpu_custom_call.1} parent=1 // loop_header_branch
      %22 = sbr.rel (%p20) target = $region8
    $region5: #{tpu_custom_call.1} parent=1 // loop_body
      %s24 = ssub.s32 %s19, 1
      %s25 = ssub.s32 %s19, 2
      %s32 = sadd.s32 1, %s27
      %p33 = scmp.ge.s32.totalorder %s32, 8
      %s34 = scalar_select %p33, 0, %s32
      %s35 = sadd.s32 1, %s26
      %s36 = scalar_select %p33, %s35, %s26
      %p37 = scmp.ge.s32.totalorder %s36, 1
      %s38 = scalar_select %p37, 0, %s36
      %s39 = ssub.s32 %s27, %s34
      %s40 = ssub.s32 %s26, %s38
      %s41 = sor.u32 %s39, %s40
      %p42 = scmp.eq.s32.totalorder %s41, 0
      %s44 = sadd.s32 %s43, 1
      %s45 = scalar_select %p42, %s43, %s44
      %p48 = pneg %p42
      %p49 = scmp.eq.s32.totalorder %s19, 7
      %p50 = por %p48, %p49
      %p51 = scmp.ne.s32.totalorder %s43, %s46
      %p52 = scmp.eq.s32.totalorder %s19, 0
      %p53 = por %p51, %p52
      %p54 = scmp.ne.s32.totalorder %s43, %s46
      %p55 = scmp.eq.s32.totalorder %s24, 7
      %p56 = por %p54, %p55
      %p57 = scmp.ne.s32.totalorder %s46, %s47
      %p58 = scmp.eq.s32.totalorder %s24, 0
      %p59 = por %p57, %p58
      %p60 = scmp.ne.s32.totalorder %s46, %s47
      %p61 = scmp.eq.s32.totalorder %s25, 7
      %p62 = por %p60, %p61
      %p64 = scmp.ne.s32.totalorder %s47, %s63
      %p65 = scmp.eq.s32.totalorder %s25, 0
      %p66 = por %p64, %p65
      %s68 = sadd.s32 %s67, 1
      %p71 = scmp.eq.s32.totalorder %s19, 7
      %p72 = scmp.ne.s32.totalorder %s67, %s69
      %p73 = scmp.eq.s32.totalorder %s19, 0
      %p74 = por %p72, %p73
      %p75 = scmp.ne.s32.totalorder %s67, %s69
      %p76 = scmp.eq.s32.totalorder %s24, 7
      %p77 = por %p75, %p76
      %p78 = scmp.ne.s32.totalorder %s69, %s70
      %p79 = scmp.eq.s32.totalorder %s24, 0
      %p80 = por %p78, %p79
      %p81 = scmp.ne.s32.totalorder %s69, %s70
      %p82 = scmp.eq.s32.totalorder %s25, 7
      %p83 = por %p81, %p82
      %p85 = scmp.ne.s32.totalorder %s70, %s84
      %p86 = scmp.eq.s32.totalorder %s25, 0
      %p87 = por %p85, %p86
      %s89 = sadd.s32 %s88, 1
      %p92 = scmp.eq.s32.totalorder %s19, 7
      %p93 = scmp.ne.s32.totalorder %s88, %s90
      %p94 = scmp.eq.s32.totalorder %s19, 0
      %p95 = por %p93, %p94
      %p96 = scmp.ne.s32.totalorder %s88, %s90
      %p97 = scmp.eq.s32.totalorder %s24, 7
      %p98 = por %p96, %p97
      %p99 = scmp.ne.s32.totalorder %s90, %s91
      %p100 = scmp.eq.s32.totalorder %s24, 0
      %p101 = por %p99, %p100
      %p102 = scmp.ne.s32.totalorder %s90, %s91
      %p103 = scmp.eq.s32.totalorder %s25, 7
      %p104 = por %p102, %p103
      %p106 = scmp.ne.s32.totalorder %s91, %s105
      %p107 = scmp.eq.s32.totalorder %s25, 0
      %p108 = por %p106, %p107
      %s109 = ssub.s32 %s26, %s38
      %p110 = scmp.eq.s32.totalorder %s109, 0
      %s112 = sadd.s32 %s111, 1
      %s113 = scalar_select %p110, %s111, %s112
      %p116 = pneg %p110
      %p117 = scmp.eq.s32.totalorder %s19, 7
      %p118 = por %p116, %p117
      %p119 = scmp.ne.s32.totalorder %s111, %s114
      %p120 = scmp.eq.s32.totalorder %s19, 0
      %p121 = por %p119, %p120
      %p122 = scmp.ne.s32.totalorder %s111, %s114
      %p123 = scmp.eq.s32.totalorder %s24, 7
      %p124 = por %p122, %p123
      %p125 = scmp.ne.s32.totalorder %s114, %s115
      %p126 = scmp.eq.s32.totalorder %s24, 0
      %p127 = por %p125, %p126
      %p128 = scmp.ne.s32.totalorder %s114, %s115
      %p129 = scmp.eq.s32.totalorder %s25, 7
      %p130 = por %p128, %p129
      %p132 = scmp.ne.s32.totalorder %s115, %s131
      %p133 = scmp.eq.s32.totalorder %s25, 0
      %p134 = por %p132, %p133
      %s135 = ssub.s32 %s26, %s38
      %p136 = scmp.eq.s32.totalorder %s135, 0
      %s138 = sadd.s32 %s137, 1
      %s139 = scalar_select %p136, %s137, %s138
      %p142 = pneg %p136
      %p143 = scmp.eq.s32.totalorder %s19, 7
      %p144 = por %p142, %p143
      %p145 = scmp.ne.s32.totalorder %s137, %s140
      %p146 = scmp.eq.s32.totalorder %s19, 0
      %p147 = por %p145, %p146
      %p148 = scmp.ne.s32.totalorder %s137, %s140
      %p149 = scmp.eq.s32.totalorder %s24, 7
      %p150 = por %p148, %p149
      %p151 = scmp.ne.s32.totalorder %s140, %s141
      %p152 = scmp.eq.s32.totalorder %s24, 0
      %p153 = por %p151, %p152
      %p154 = scmp.ne.s32.totalorder %s140, %s141
      %p155 = scmp.eq.s32.totalorder %s25, 7
      %p156 = por %p154, %p155
      %p158 = scmp.ne.s32.totalorder %s141, %s157
      %p159 = scmp.eq.s32.totalorder %s25, 0
      %p160 = por %p158, %p159
      %s161 = ssub.s32 %s26, %s38
      %p162 = scmp.eq.s32.totalorder %s161, 0
      %s164 = sadd.s32 %s163, 1
      %s165 = scalar_select %p162, %s163, %s164
      %p168 = pneg %p162
      %p169 = scmp.eq.s32.totalorder %s19, 7
      %p170 = por %p168, %p169
      %p171 = scmp.ne.s32.totalorder %s163, %s166
      %p172 = scmp.eq.s32.totalorder %s19, 0
      %p173 = por %p171, %p172
      %p174 = scmp.ne.s32.totalorder %s163, %s166
      %p175 = scmp.eq.s32.totalorder %s24, 7
      %p176 = por %p174, %p175
      %p177 = scmp.ne.s32.totalorder %s166, %s167
      %p178 = scmp.eq.s32.totalorder %s24, 0
      %p179 = por %p177, %p178
      %p180 = scmp.ne.s32.totalorder %s166, %s167
      %p181 = scmp.eq.s32.totalorder %s25, 7
      %p182 = por %p180, %p181
      %p184 = scmp.ne.s32.totalorder %s167, %s183
      %p185 = scmp.eq.s32.totalorder %s25, 0
      %p186 = por %p184, %p185
      %s187 = ssub.s32 %s27, %s34
      %s188 = ssub.s32 %s26, %s38
      %s189 = sor.u32 %s187, %s188
      %p190 = scmp.eq.s32.totalorder %s189, 0
      %s192 = sadd.s32 %s191, 1
      %s193 = scalar_select %p190, %s191, %s192
      %p196 = pneg %p190
      %p197 = scmp.eq.s32.totalorder %s19, 7
      %p198 = por %p196, %p197
      %p199 = scmp.ne.s32.totalorder %s191, %s194
      %p200 = scmp.eq.s32.totalorder %s19, 0
      %p201 = por %p199, %p200
      %p202 = scmp.ne.s32.totalorder %s191, %s194
      %p203 = scmp.eq.s32.totalorder %s24, 7
      %p204 = por %p202, %p203
      %p205 = scmp.ne.s32.totalorder %s194, %s195
      %p206 = scmp.eq.s32.totalorder %s24, 0
      %p207 = por %p205, %p206
      %p208 = scmp.ne.s32.totalorder %s194, %s195
      %p209 = scmp.eq.s32.totalorder %s25, 7
      %p210 = por %p208, %p209
      %p212 = scmp.ne.s32.totalorder %s195, %s211
      %p213 = scmp.eq.s32.totalorder %s25, 0
      %p214 = por %p212, %p213
      %s215 = ssub.s32 %s26, %s38
      %p216 = scmp.eq.s32.totalorder %s215, 0
      %s218 = sadd.s32 %s217, 1
      %s219 = scalar_select %p216, %s217, %s218
      %p222 = pneg %p216
      %p223 = scmp.eq.s32.totalorder %s19, 7
      %p224 = por %p222, %p223
      %p225 = scmp.ne.s32.totalorder %s217, %s220
      %p226 = scmp.eq.s32.totalorder %s19, 0
      %p227 = por %p225, %p226
      %p228 = scmp.ne.s32.totalorder %s217, %s220
      %p229 = scmp.eq.s32.totalorder %s24, 7
      %p230 = por %p228, %p229
      %p231 = scmp.ne.s32.totalorder %s220, %s221
      %p232 = scmp.eq.s32.totalorder %s24, 0
      %p233 = por %p231, %p232
      %p234 = scmp.ne.s32.totalorder %s220, %s221
      %p235 = scmp.eq.s32.totalorder %s25, 7
      %p236 = por %p234, %p235
      %p238 = scmp.ne.s32.totalorder %s221, %s237
      %p239 = scmp.eq.s32.totalorder %s25, 0
      %p240 = por %p238, %p239
      %s241 = ssub.s32 %s26, %s38
      %p242 = scmp.eq.s32.totalorder %s241, 0
      %s244 = sadd.s32 %s243, 1
      %s245 = scalar_select %p242, %s243, %s244
      %p248 = pneg %p242
      %p249 = scmp.eq.s32.totalorder %s19, 7
      %p250 = por %p248, %p249
      %p251 = scmp.ne.s32.totalorder %s243, %s246
      %p252 = scmp.eq.s32.totalorder %s19, 0
      %p253 = por %p251, %p252
      %p254 = scmp.ne.s32.totalorder %s243, %s246
      %p255 = scmp.eq.s32.totalorder %s24, 7
      %p256 = por %p254, %p255
      %p257 = scmp.ne.s32.totalorder %s246, %s247
      %p258 = scmp.eq.s32.totalorder %s24, 0
      %p259 = por %p257, %p258
      %p260 = scmp.ne.s32.totalorder %s246, %s247
      %p261 = scmp.eq.s32.totalorder %s25, 7
      %p262 = por %p260, %p261
      %p264 = scmp.ne.s32.totalorder %s247, %s263
      %p265 = scmp.eq.s32.totalorder %s25, 0
      %p266 = por %p264, %p265
      %s267 = ssub.s32 %s26, %s38
      %p268 = scmp.eq.s32.totalorder %s267, 0
      %s270 = sadd.s32 %s269, 1
      %s271 = scalar_select %p268, %s269, %s270
      %p274 = pneg %p268
      %p275 = scmp.eq.s32.totalorder %s19, 7
      %p276 = por %p274, %p275
      %p277 = scmp.ne.s32.totalorder %s269, %s272
      %p278 = scmp.eq.s32.totalorder %s19, 0
      %p279 = por %p277, %p278
      %p280 = scmp.ne.s32.totalorder %s269, %s272
      %p281 = scmp.eq.s32.totalorder %s24, 7
      %p282 = por %p280, %p281
      %p283 = scmp.ne.s32.totalorder %s272, %s273
      %p284 = scmp.eq.s32.totalorder %s24, 0
      %p285 = por %p283, %p284
      %p286 = scmp.ne.s32.totalorder %s272, %s273
      %p287 = scmp.eq.s32.totalorder %s25, 7
      %p288 = por %p286, %p287
      %p290 = scmp.ne.s32.totalorder %s273, %s289
      %p291 = scmp.eq.s32.totalorder %s25, 0
      %p292 = por %p290, %p291
      %p293 = scmp.le.s32.totalorder 1, %s19
      %p294 = scmp.lt.s32.totalorder %s19, 9
      %p295 = pnand %p293, %p294
      %p296 = pneg %p295
      // Predicated region
      $region9: #{tpu_custom_call.1} parent=5 // pred_check
        _
      $region10: #{tpu_custom_call.1} parent=5 // pred_check_branch
        %298 = sbr.rel (%p295) target = $region12
      $region11: #{tpu_custom_call.1} parent=5 // pred_region
        %s299 = ssub.s32 %s19, 1
        // Predicated region
        $region13: #{tpu_custom_call.1} parent=11 // pred_check
          %p300 = pneg %p80
        $region14: #{tpu_custom_call.1} parent=11 // pred_check_branch
          %302 = sbr.rel (%p300) target = $region16
        $region15: #{tpu_custom_call.1} parent=11 // pred_region
          _
        $region16: #{tpu_custom_call.1} parent=11 // pred_fallthru
          _
        // Predicated region
        $region17: #{tpu_custom_call.1} parent=11 // pred_check
          %p303 = pneg %p101
        $region18: #{tpu_custom_call.1} parent=11 // pred_check_branch
          %305 = sbr.rel (%p303) target = $region20
        $region19: #{tpu_custom_call.1} parent=11 // pred_region
          _
        $region20: #{tpu_custom_call.1} parent=11 // pred_fallthru
          _
        // Predicated region
        $region21: #{tpu_custom_call.1} parent=11 // pred_check
          %p306 = pneg %p127
        $region22: #{tpu_custom_call.1} parent=11 // pred_check_branch
          %308 = sbr.rel (%p306) target = $region24
        $region23: #{tpu_custom_call.1} parent=11 // pred_region
          %s309 = smul.u32 2, %s28
          %p310 = scmp.lt.s32.totalorder %s309, 1
          %s311 = scalar_select %p310, %s309, 1
          %s312 = smul.addr %s311, 4
          %s313 = smul.addr %s312, 8
          %s314 = scalar_lea.vmem %s3, %s313
          %s315 = smul.u32 2, %s28
        $region24: #{tpu_custom_call.1} parent=11 // pred_fallthru
          _
        // Predicated region
        $region25: #{tpu_custom_call.1} parent=11 // pred_check
          %p316 = pneg %p153
        $region26: #{tpu_custom_call.1} parent=11 // pred_check_branch
          %318 = sbr.rel (%p316) target = $region28
        $region27: #{tpu_custom_call.1} parent=11 // pred_region
          %p319 = scmp.lt.s32.totalorder %s28, 0
          %s320 = scalar_select %p319, %s28, 0
          %s321 = smul.addr %s320, 2
          %s322 = scalar_lea.vmem %s4, %s321
        $region28: #{tpu_custom_call.1} parent=11 // pred_fallthru
          _
        // Predicated region
        $region29: #{tpu_custom_call.1} parent=11 // pred_check
          %p323 = pneg %p179
        $region30: #{tpu_custom_call.1} parent=11 // pred_check_branch
          %325 = sbr.rel (%p323) target = $region32
        $region31: #{tpu_custom_call.1} parent=11 // pred_region
          %p326 = scmp.lt.s32.totalorder %s28, 0
          %s327 = scalar_select %p326, %s28, 0
          %s328 = smul.addr %s327, 2
          %s329 = scalar_lea.vmem %s5, %s328
        $region32: #{tpu_custom_call.1} parent=11 // pred_fallthru
          _
      $region12: #{tpu_custom_call.1} parent=5 // pred_fallthru
        _
      %p330 = scmp.lt.s32.totalorder %s19, 8
      // Predicated region
      $region33: #{tpu_custom_call.1} parent=5 // pred_check
        %p331 = pneg %p330
      $region34: #{tpu_custom_call.1} parent=5 // pred_check_branch
        %333 = sbr.rel (%p331) target = $region36
      $region35: #{tpu_custom_call.1} parent=5 // pred_region
        // Predicated region
        $region37: #{tpu_custom_call.1} parent=35 // pred_check
          %p334 = pneg %p53
        $region38: #{tpu_custom_call.1} parent=35 // pred_check_branch
          %336 = sbr.rel (%p334) target = $region40
        $region39: #{tpu_custom_call.1} parent=35 // pred_region
          %p337 = scmp.lt.s32.totalorder %s27, 7
          %s338 = scalar_select %p337, %s27, 7
          %p339 = scmp.lt.s32.totalorder %s26, 0
          %s340 = scalar_select %p339, %s26, 0
          %s341 = sadd.s32 %s340, %s338
          %s342 = smul.addr %s341, 2
          %s343 = scalar_lea.vmem %s0, %s342
        $region40: #{tpu_custom_call.1} parent=35 // pred_fallthru
          _
      $region36: #{tpu_custom_call.1} parent=5 // pred_fallthru
        _
      %p344 = scmp.le.s32.totalorder 1, %s19
      %p345 = scmp.lt.s32.totalorder %s19, 9
      %p346 = pnand %p344, %p345
      %p347 = pneg %p346
      // Predicated region
      $region41: #{tpu_custom_call.1} parent=5 // pred_check
        _
      $region42: #{tpu_custom_call.1} parent=5 // pred_check_branch
        %349 = sbr.rel (%p346) target = $region44
      $region43: #{tpu_custom_call.1} parent=5 // pred_region
        %s350 = ssub.s32 %s19, 1
        %p351 = scmp.lt.s32.totalorder %s29, 7
        %s352 = scalar_select %p351, %s29, 7
        %p353 = scmp.lt.s32.totalorder %s28, 0
        %s354 = scalar_select %p353, %s28, 0
        %s355 = sadd.s32 %s354, %s352
        %s356 = smul.addr %s355, 2
        %s357 = scalar_lea.vmem %s0, %s356
        %p358 = pneg %p59
        %p359 = pneg %p56
        %p360 = pneg %p80
        %p361 = pneg %p77
        %p362 = pneg %p101
        %p363 = pneg %p98
        %s364 = smul.u32 2, %s28
        %p365 = scmp.lt.s32.totalorder %s364, 1
        %s366 = scalar_select %p365, %s364, 1
        %s367 = smul.addr %s366, 4
        %s368 = smul.addr %s367, 8
        %s369 = scalar_lea.vmem %s3, %s368
        %p370 = pneg %p127
        %p371 = pneg %p124
        %p372 = scmp.lt.s32.totalorder %s28, 0
        %s373 = scalar_select %p372, %s28, 0
        %s374 = smul.addr %s373, 2
        %s375 = scalar_lea.vmem %s4, %s374
        %p376 = pneg %p153
        %p377 = pneg %p150
        %p378 = scmp.lt.s32.totalorder %s28, 0
        %s379 = scalar_select %p378, %s28, 0
        %s380 = smul.addr %s379, 2
        %s381 = scalar_lea.vmem %s5, %s380
        %p382 = pneg %p179
        %p383 = pneg %p176
        %p384 = pneg %p207
        %p385 = pneg %p204
        %s386 = sand.u32 %s194, 1
        %s387 = scalar_lea.sflag [#allocation3], %s386
        %s388 = sand.u32 %s194, 1
        %s389 = smul.addr %s388, 2
        %s390 = scalar_lea.vmem [#allocation2], %s389
        %p391 = pneg %p233
        %p392 = pneg %p230
        %s393 = smul.u32 2, %s28
        %p394 = scmp.lt.s32.totalorder %s393, 1
        %s395 = scalar_select %p394, %s393, 1
        %s396 = smul.addr %s395, 4
        %s397 = smul.addr %s396, 8
        %s398 = scalar_lea.vmem %s7, %s397
        %p399 = pneg %p259
        %p400 = pneg %p256
        %p401 = scmp.lt.s32.totalorder %s28, 0
        %s402 = scalar_select %p401, %s28, 0
        %s403 = smul.addr %s402, 2
        %s404 = scalar_lea.vmem %s8, %s403
        %p405 = pneg %p285
        %p406 = pneg %p282
        %p407 = scmp.lt.s32.totalorder %s28, 0
        %s408 = scalar_select %p407, %s28, 0
        %s409 = smul.addr %s408, 2
        %s410 = scalar_lea.vmem %s9, %s409
        %p411 = scmp.lt.s32.totalorder %s29, 7
        %s412 = scalar_select %p411, %s29, 7
        %p413 = scmp.lt.s32.totalorder %s28, 0
        %s414 = scalar_select %p413, %s28, 0
        %s415 = sadd.s32 %s414, %s412
        %s416 = smul.addr %s415, 2
        %s417 = scalar_lea.vmem %s0, %s416
        %s418 = smul.u32 2, %s28
        %p419 = scmp.lt.s32.totalorder %s418, 1
        %s420 = scalar_select %p419, %s418, 1
        %s421 = smul.addr %s420, 4
        %s422 = smul.addr %s421, 8
        %s423 = scalar_lea.vmem %s3, %s422
        %s424 = smul.u32 2, %s28
        %p425 = scmp.lt.s32.totalorder %s28, 0
        %s426 = scalar_select %p425, %s28, 0
        %s427 = smul.addr %s426, 2
        %s428 = scalar_lea.vmem %s4, %s427
        %p429 = scmp.lt.s32.totalorder %s28, 0
        %s430 = scalar_select %p429, %s28, 0
        %s431 = smul.addr %s430, 2
        %s432 = scalar_lea.vmem %s5, %s431
        %s433 = smul.u32 2, %s28
        %p434 = scmp.lt.s32.totalorder %s433, 1
        %s435 = scalar_select %p434, %s433, 1
        %s436 = smul.addr %s435, 4
        %s437 = smul.addr %s436, 8
        %s438 = scalar_lea.vmem %s7, %s437
        %s439 = smul.u32 2, %s28
        %p440 = scmp.lt.s32.totalorder %s28, 0
        %s441 = scalar_select %p440, %s28, 0
        %s442 = smul.addr %s441, 2
        %s443 = scalar_lea.vmem %s8, %s442
        %p444 = scmp.lt.s32.totalorder %s28, 0
        %s445 = scalar_select %p444, %s28, 0
        %s446 = smul.addr %s445, 2
        %s447 = scalar_lea.vmem %s9, %s446
        %p449 = scmp.eq.s32.totalorder %s29, 0
        // Predicated region
        $region45: #{tpu_custom_call.1} parent=43 // pred_check
          %p450 = pneg %p449
        $region46: #{tpu_custom_call.1} parent=43 // pred_check_branch
          %452 = sbr.rel (%p450) target = $region48
        $region47: #{tpu_custom_call.1} parent=43 // pred_region
          %v453 = vld [vmem:[%s423] sm:$0xff]
          %v454 = vld [vmem:[%s423 + $0x8] sm:$0xff]
          %v455 = vld [vmem:[%s423 + $0x10] sm:$0xff]
          %v456 = vld [vmem:[%s423 + $0x18] sm:$0xff]
          %v457 = vld [vmem:[%s423 + $0x20] sm:$0xff]
          %v458 = vld [vmem:[%s423 + $0x28] sm:$0xff]
          %v459 = vld [vmem:[%s423 + $0x30] sm:$0xff]
          %v460 = vld [vmem:[%s423 + $0x38] sm:$0xff]
          %vm461 = vcmask 261120
          %462 = vst.msk [vmem:[%s438] sm:$0xff] %vm461, %v453
          %463 = vst.msk [vmem:[%s438 + $0x8] sm:$0xff] %vm461, %v454
          %464 = vst.msk [vmem:[%s438 + $0x10] sm:$0xff] %vm461, %v455
          %465 = vst.msk [vmem:[%s438 + $0x18] sm:$0xff] %vm461, %v456
          %466 = vst.msk [vmem:[%s438 + $0x20] sm:$0xff] %vm461, %v457
          %467 = vst.msk [vmem:[%s438 + $0x28] sm:$0xff] %vm461, %v458
          %468 = vst.msk [vmem:[%s438 + $0x30] sm:$0xff] %vm461, %v459
          %469 = vst.msk [vmem:[%s438 + $0x38] sm:$0xff] %vm461, %v460
          %v470 = vld [vmem:[%s428] sm:$0x3]
          %vm471 = vcmask 254976
          %472 = vst.msk [vmem:[%s443] sm:$0x3] %vm471, %v470
          %v473 = vld [vmem:[%s432] sm:$0x3]
          %vm474 = vcmask 1024
          %475 = vst.msk [vmem:[%s447] sm:$0x3] %vm474, %v473
        $region48: #{tpu_custom_call.1} parent=43 // pred_fallthru
          _
        %v476 = vld [vmem:[%s417] sm:$0x3]
        %v477 = vpack.c.bf16 %v476, %v476
        %v478 = vld [vmem:[%s1] sm:$0xff]
        %v479 = vld [vmem:[%s1 + $0x8] sm:$0xff]
        %v480 = vld [vmem:[%s2] sm:$0x3]
        %v482 = vlaneseq
        %v483 = vshrl.u32 %v482, 7
        %v484 = vsub.s32 0, %v483
        %v485 = vrot.slane %v480, %v484
        %v486 = vlaneseq
        %v487 = vshrl.u32 %v486, 7
        %v488 = vsub.s32 1, %v487
        %v489 = vrot.slane %v480, %v488
        %v494 = vunpack.c.l.b16 %v478
        %v495 = vunpack.c.h.b16 %v478
        %v496 = vunpack.c.l.b16 %v479
        %v497 = vunpack.c.h.b16 %v479
        %v498 = vpack.c.b16 %v496, %v494
        %v499 = vpack.c.b16 %v497, %v495
        %vm502 = vcmask 130048
        %v504 = vsel %vm502, %v477, 0
        %506 = vmatprep.subr.bf16.mxu0 0
        %507 = vmatpush1.bf16.msra.mxu0 0
        %508 = vmatprep.subr.bf16.mxu0 0
        %509 = vmatpush1.bf16.msra.mxu0 0
        %510 = vmatprep.subr.bf16.mxu0 0
        %511 = vmatpush1.bf16.msra.mxu0 0
        %512 = vmatprep.subr.bf16.mxu0 0
        %513 = vmatpush1.bf16.msra.mxu0 0
        %514 = vmatprep.subr.bf16.mxu0 0
        %515 = vmatpush1.bf16.msra.mxu0 0
        %516 = vmatprep.subr.bf16.mxu0 0
        %517 = vmatpush1.bf16.msra.mxu0 0
        %518 = vmatprep.subr.bf16.mxu0 0
        %519 = vmatpush1.bf16.msra.mxu0 0
        %520 = vmatprep.subr.bf16.mxu0 %v499
        %521 = vmatpush1.bf16.msra.mxu0 %v498
        %522 = vmatprep.subr.bf16.mxu0 0
        %523 = vmatpush2.bf16.msra.mxu0 0
        %524 = vmatprep.subr.bf16.mxu0 0
        %525 = vmatpush2.bf16.msra.mxu0 0
        %526 = vmatprep.subr.bf16.mxu0 0
        %527 = vmatpush2.bf16.msra.mxu0 0
        %528 = vmatprep.subr.bf16.mxu0 0
        %529 = vmatpush2.bf16.msra.mxu0 0
        %530 = vmatprep.subr.bf16.mxu0 0
        %531 = vmatpush2.bf16.msra.mxu0 0
        %532 = vmatprep.subr.bf16.mxu0 0
        %533 = vmatpush2.bf16.msra.mxu0 0
        %534 = vmatprep.subr.bf16.mxu0 0
        %535 = vmatpush2.bf16.msra.mxu0 0
        %536 = vmatprep.subr.bf16.mxu0 0
        %537 = vmatpush2.bf16.msra.mxu0 0
        %538 = vmatprep.mubr.bf16.mxu0 0
        %539 = vmatmul.mubr.bf16.gmra.mxu0 %v504
        %v540 = vpop.f32.mrf.mxu0
        %v541 = vadd.f32 %v485, %v540
        %v542 = vpop.f32.mrf.mxu0
        %v543 = vadd.f32 %v489, %v542
        %v544 = vpop.f32.mrf.mxu0
        %v545 = vpop.f32.mrf.mxu0
        %546 = vdwg.mxu0
        %v547 = vmul.f32 %v541, 0.17677669
        %v548 = vxor.u32 %v541, 2147483648
        %v549 = vmul.f32 %v548, 1.442695
        %v550 = vpow.pop %v549
        %v551 = vadd.f32 %v550, 1.0
        %v552 = vrcp.pop %v551
        %v553 = vmul.f32 1.0, %v552
        %v554 = vld [vmem:[%s447] sm:$0x3]
        %v555 = vld [vmem:[%s443] sm:$0x3]
        %v556 = vld [vmem:[%s438] sm:$0xff]
        %v557 = vld [vmem:[%s438 + $0x8] sm:$0xff]
        %v558 = vld [vmem:[%s438 + $0x10] sm:$0xff]
        %v559 = vld [vmem:[%s438 + $0x18] sm:$0xff]
        %v560 = vld [vmem:[%s438 + $0x20] sm:$0xff]
        %v561 = vld [vmem:[%s438 + $0x28] sm:$0xff]
        %v562 = vld [vmem:[%s438 + $0x30] sm:$0xff]
        %v563 = vld [vmem:[%s438 + $0x38] sm:$0xff]
        %565 = vrot.lane.b32.xlu0 %v554, 1
        %v566 = vpop.permute.xlu0 %565
        %v568 = vadd.f32 %v543, %v566
        %570 = vrot.lane.b32.xlu0 %v543, 1
        %v571 = vpop.permute.xlu0 %570
        %v573 = vmax.f32 %v568, %v571
        %575 = vrot.lane.b32.xlu0 %v573, 127
        %v576 = vpop.permute.xlu0 %575
        %v578 = vsub.f32 %v543, %v576
        %v579 = vmul.f32 %v578, 1.442695
        %v580 = vpow.pop %v579
        %v581 = vsub.f32 %v568, %v573
        %v582 = vmul.f32 %v581, 1.442695
        %v583 = vpow.pop %v582
        %v586 = vunpack.c.l.s4 1966171168
        %v587 = vunpack.c.0.s8 %v586
        %v588 = vlaneseq
        %v589 = vshrl.u32 %v588, 7
        %v590 = vsub.s32 %v587, %v589
        %v591 = vrot.slane %v541, %v590
        %v592 = vcombine.high %v591, %v591
        %v594 = vunpack.c.l.s4 1966171168
        %v595 = vunpack.c.0.s8 %v594
        %v596 = vlaneseq
        %v597 = vshrl.u32 %v596, 7
        %v598 = vsub.s32 %v595, %v597
        %v599 = vrot.slane %v591, %v598
        %v601 = vunpack.c.l.s4 1966171168
        %v602 = vunpack.c.0.s8 %v601
        %v603 = vlaneseq
        %v604 = vshrl.u32 %v603, 7
        %v605 = vsub.s32 %v602, %v604
        %v606 = vrot.slane %v592, %v605
        %v607 = vlaneseq
        %v608 = vshrl.u32 %v607, 7
        %v609 = vsub.s32 0, %v608
        %v610 = vrot.slane %v599, %v609
        %v611 = vlaneseq
        %v612 = vshrl.u32 %v611, 7
        %v613 = vsub.s32 0, %v612
        %v614 = vrot.slane %v606, %v613
        %v617 = vmul.f32 %v556, %v610
        %v618 = vmul.f32 %v557, %v610
        %v619 = vmul.f32 %v558, %v610
        %v620 = vmul.f32 %v559, %v610
        %v621 = vmul.f32 %v560, %v614
        %v622 = vmul.f32 %v561, %v614
        %v623 = vmul.f32 %v562, %v614
        %v624 = vmul.f32 %v563, %v614
        %vm625 = vcmask 261120
        %v626 = vsel %vm625, %v617, 0.0
        %627 = vadd.xlane.f32.xlu0 %v626
        %v628 = vpop.xlane.xlu0 %627
        %v629 = vsel %vm625, %v618, 0.0
        %630 = vadd.xlane.f32.xlu0 %v629
        %v631 = vpop.xlane.xlu0 %630
        %v632 = vsel %vm625, %v619, 0.0
        %633 = vadd.xlane.f32.xlu0 %v632
        %v634 = vpop.xlane.xlu0 %633
        %v635 = vsel %vm625, %v620, 0.0
        %636 = vadd.xlane.f32.xlu0 %v635
        %v637 = vpop.xlane.xlu0 %636
        %v638 = vsel %vm625, %v621, 0.0
        %639 = vadd.xlane.f32.xlu0 %v638
        %v640 = vpop.xlane.xlu0 %639
        %v641 = vsel %vm625, %v622, 0.0
        %642 = vadd.xlane.f32.xlu0 %v641
        %v643 = vpop.xlane.xlu0 %642
        %v644 = vsel %vm625, %v623, 0.0
        %645 = vadd.xlane.f32.xlu0 %v644
        %v646 = vpop.xlane.xlu0 %645
        %v647 = vsel %vm625, %v624, 0.0
        %648 = vadd.xlane.f32.xlu0 %v647
        %v649 = vpop.xlane.xlu0 %648
        %650 = vrot.lane.b32.xlu0 %v541, 32
        %v651 = vpop.permute.xlu0 %650
        %v653 = vmul.f32 %v547, %v651
        %655 = vrot.lane.b32.xlu0 %v653, 96
        %v656 = vpop.permute.xlu0 %655
        %vm658 = vcmask 254976
        %v659 = vsel %vm658, %v656, 0.0
        %660 = vadd.xlane.f32.xlu0 %v659
        %v661 = vpop.xlane.xlu0 %660
        %663 = vset.pattern.permute.xlu0 1
        %664 = vperm.xlu0 %663, %v583
        %v665 = vpop.permute.xlu0 %664
        %v667 = vmul.f32 %v665, %v555
        %669 = vset.pattern.permute.xlu0 0
        %670 = vperm.xlu0 %669, %v580
        %v671 = vpop.permute.xlu0 %670
        %v673 = vmul.f32 %v671, %v547
        %675 = vrot.lane.b32.xlu0 %v673, 96
        %v676 = vpop.permute.xlu0 %675
        %v678 = vadd.f32 %v667, %v676
        %v687 = vlaneseq
        %v688 = vand.u32 %v687, 127
        %v689 = vlaneseq
        %v690 = vshrl.u32 %v689, 7
        %v691 = vsub.s32 %v688, %v690
        %v692 = vrot.slane %v628, %v691
        %v693 = vadd.s32 %v688, 4294967288
        %v694 = vlaneseq
        %v695 = vshrl.u32 %v694, 7
        %v696 = vsub.s32 %v693, %v695
        %v697 = vrot.slane %v631, %v696
        %vm698 = vcmask 130112
        %v699 = vsel %vm698, %v697, %v692
        %v700 = vadd.s32 %v688, 4294967280
        %v701 = vlaneseq
        %v702 = vshrl.u32 %v701, 7
        %v703 = vsub.s32 %v700, %v702
        %v704 = vrot.slane %v634, %v703
        %vm705 = vcmask 195712
        %v706 = vsel %vm705, %v704, %v699
        %v707 = vadd.s32 %v688, 4294967272
        %v708 = vlaneseq
        %v709 = vshrl.u32 %v708, 7
        %v710 = vsub.s32 %v707, %v709
        %v711 = vrot.slane %v637, %v710
        %vm712 = vcmask 261312
        %v713 = vsel %vm712, %v711, %v706
        %v714 = vlaneseq
        %v715 = vshrl.u32 %v714, 7
        %v716 = vsub.s32 %v688, %v715
        %v717 = vrot.slane %v640, %v716
        %v718 = vlaneseq
        %v719 = vshrl.u32 %v718, 7
        %v720 = vsub.s32 %v693, %v719
        %v721 = vrot.slane %v643, %v720
        %v722 = vsel %vm698, %v721, %v717
        %v723 = vlaneseq
        %v724 = vshrl.u32 %v723, 7
        %v725 = vsub.s32 %v700, %v724
        %v726 = vrot.slane %v646, %v725
        %v727 = vsel %vm705, %v726, %v722
        %v728 = vlaneseq
        %v729 = vshrl.u32 %v728, 7
        %v730 = vsub.s32 %v707, %v729
        %v731 = vrot.slane %v649, %v730
        %v732 = vsel %vm712, %v731, %v727
        %vm733 = vcmask 1041409
        %v734 = vsel %vm733, %v732, %v713
        %v736 = vmul.f32 %v665, %v734
        %v737 = vmul.f32 %v580, %v661
        %739 = vset.pattern.permute.xlu0 0
        %740 = vperm.xlu0 %739, %v737
        %v741 = vpop.permute.xlu0 %740
        %v743 = vmul.f32 %v741, %v541
        %745 = vrot.lane.b32.xlu0 %v743, 64
        %v746 = vpop.permute.xlu0 %745
        %v748 = vadd.f32 %v736, %v746
        %v749 = vmul.f32 %v678, %v541
        %v750 = vsel %vm658, %v749, 0.0
        %751 = vadd.xlane.f32.xlu0 %v750
        %v752 = vpop.xlane.xlu0 %751
        %v753 = vand.u32 2147483647, %v752
        %v754 = vmax.f32 %v753, 1.0
        %756 = vrot.lane.b32.xlu0 %v748, 96
        %v757 = vpop.permute.xlu0 %756
        %v759 = vmul.f32 %v553, %v757
        %v760 = vrcp.pop %v754
        %v761 = vmul.f32 %v759, %v760
        %763 = vrot.lane.b32.xlu0 %v761, 32
        %v764 = vpop.permute.xlu0 %763
        %766 = vst.msk [vmem:[%s390] sm:$0x3] %vm658, %v764
        %v768 = vunpack.c.l.s4 1966171168
        %v769 = vunpack.c.0.s8 %v768
        %v770 = vlaneseq
        %v771 = vshrl.u32 %v770, 7
        %v772 = vsub.s32 %v769, %v771
        %v773 = vrot.slane %v583, %v772
        %v774 = vcombine.high %v773, %v773
        %v776 = vunpack.c.l.s4 1966171168
        %v777 = vunpack.c.0.s8 %v776
        %v778 = vlaneseq
        %v779 = vshrl.u32 %v778, 7
        %v780 = vsub.s32 %v777, %v779
        %v781 = vrot.slane %v773, %v780
        %v783 = vunpack.c.l.s4 1966171168
        %v784 = vunpack.c.0.s8 %v783
        %v785 = vlaneseq
        %v786 = vshrl.u32 %v785, 7
        %v787 = vsub.s32 %v784, %v786
        %v788 = vrot.slane %v774, %v787
        %v790 = vunpack.c.l.s4 1966171168
        %v791 = vunpack.c.0.s8 %v790
        %v792 = vlaneseq
        %v793 = vshrl.u32 %v792, 7
        %v794 = vsub.s32 %v791, %v793
        %v795 = vrot.slane %v580, %v794
        %v796 = vcombine.high %v795, %v795
        %v798 = vunpack.c.l.s4 1966171168
        %v799 = vunpack.c.0.s8 %v798
        %v800 = vlaneseq
        %v801 = vshrl.u32 %v800, 7
        %v802 = vsub.s32 %v799, %v801
        %v803 = vrot.slane %v795, %v802
        %v805 = vunpack.c.l.s4 1966171168
        %v806 = vunpack.c.0.s8 %v805
        %v807 = vlaneseq
        %v808 = vshrl.u32 %v807, 7
        %v809 = vsub.s32 %v806, %v808
        %v810 = vrot.slane %v796, %v809
        %v811 = vlaneseq
        %v812 = vshrl.u32 %v811, 7
        %v813 = vsub.s32 0, %v812
        %v814 = vrot.slane %v781, %v813
        %v815 = vlaneseq
        %v816 = vshrl.u32 %v815, 7
        %v817 = vsub.s32 0, %v816
        %v818 = vrot.slane %v788, %v817
        %819 = vset.pattern.permute.xlu0 1
        %820 = vperm.xlu0 %819, %v814
        %v821 = vpop.permute.xlu0 %820
        %823 = vset.pattern.permute.xlu0 1
        %824 = vperm.xlu0 %823, %v818
        %v825 = vpop.permute.xlu0 %824
        %v827 = vmul.f32 %v821, %v556
        %v828 = vmul.f32 %v821, %v557
        %v829 = vmul.f32 %v821, %v558
        %v830 = vmul.f32 %v821, %v559
        %v831 = vmul.f32 %v825, %v560
        %v832 = vmul.f32 %v825, %v561
        %v833 = vmul.f32 %v825, %v562
        %v834 = vmul.f32 %v825, %v563
        %v835 = vlaneseq
        %v836 = vshrl.u32 %v835, 7
        %v837 = vsub.s32 0, %v836
        %v838 = vrot.slane %v541, %v837
        %s840 = sor.u32 256, 64
        %841 = vbcast.lane.b32.xlu0 %v838, %s840
        %v842 = vpop.permute.xlu0 %841
        %s844 = sor.u32 256, 72
        %845 = vbcast.lane.b32.xlu0 %v838, %s844
        %v846 = vpop.permute.xlu0 %845
        %s848 = sor.u32 256, 80
        %849 = vbcast.lane.b32.xlu0 %v838, %s848
        %v850 = vpop.permute.xlu0 %849
        %s852 = sor.u32 256, 88
        %853 = vbcast.lane.b32.xlu0 %v838, %s852
        %v854 = vpop.permute.xlu0 %853
        %v855 = vlaneseq
        %v856 = vshrl.u32 %v855, 7
        %v857 = vsub.s32 1, %v856
        %v858 = vrot.slane %v541, %v857
        %s860 = sor.u32 256, 64
        %861 = vbcast.lane.b32.xlu0 %v858, %s860
        %v862 = vpop.permute.xlu0 %861
        %s864 = sor.u32 256, 72
        %865 = vbcast.lane.b32.xlu0 %v858, %s864
        %v866 = vpop.permute.xlu0 %865
        %s868 = sor.u32 256, 80
        %869 = vbcast.lane.b32.xlu0 %v858, %s868
        %v870 = vpop.permute.xlu0 %869
        %s872 = sor.u32 256, 88
        %873 = vbcast.lane.b32.xlu0 %v858, %s872
        %v874 = vpop.permute.xlu0 %873
        %v875 = vlaneseq
        %v876 = vshrl.u32 %v875, 7
        %v877 = vsub.s32 0, %v876
        %v878 = vrot.slane %v803, %v877
        %v879 = vlaneseq
        %v880 = vshrl.u32 %v879, 7
        %v881 = vsub.s32 0, %v880
        %v882 = vrot.slane %v810, %v881
        %v885 = vmul.f32 %v878, %v842
        %v886 = vmul.f32 %v878, %v846
        %v887 = vmul.f32 %v878, %v850
        %v888 = vmul.f32 %v878, %v854
        %v889 = vmul.f32 %v882, %v862
        %v890 = vmul.f32 %v882, %v866
        %v891 = vmul.f32 %v882, %v870
        %v892 = vmul.f32 %v882, %v874
        %v895 = vunpack.c.l.s4 1966171168
        %v896 = vunpack.c.0.s8 %v895
        %v897 = vlaneseq
        %v898 = vshrl.u32 %v897, 7
        %v899 = vsub.s32 %v896, %v898
        %v900 = vrot.slane %v547, %v899
        %v901 = vcombine.high %v900, %v900
        %v903 = vunpack.c.l.s4 1966171168
        %v904 = vunpack.c.0.s8 %v903
        %v905 = vlaneseq
        %v906 = vshrl.u32 %v905, 7
        %v907 = vsub.s32 %v904, %v906
        %v908 = vrot.slane %v900, %v907
        %v910 = vunpack.c.l.s4 1966171168
        %v911 = vunpack.c.0.s8 %v910
        %v912 = vlaneseq
        %v913 = vshrl.u32 %v912, 7
        %v914 = vsub.s32 %v911, %v913
        %v915 = vrot.slane %v901, %v914
        %917 = vset.pattern.permute.xlu0 0
        %918 = vperm.xlu0 %917, %v885
        %v919 = vpop.permute.xlu0 %918
        %922 = vset.pattern.permute.xlu0 0
        %923 = vperm.xlu0 %922, %v886
        %v924 = vpop.permute.xlu0 %923
        %927 = vset.pattern.permute.xlu0 0
        %928 = vperm.xlu0 %927, %v887
        %v929 = vpop.permute.xlu0 %928
        %932 = vset.pattern.permute.xlu0 0
        %933 = vperm.xlu0 %932, %v888
        %v934 = vpop.permute.xlu0 %933
        %937 = vset.pattern.permute.xlu0 0
        %938 = vperm.xlu0 %937, %v889
        %v939 = vpop.permute.xlu0 %938
        %942 = vset.pattern.permute.xlu0 0
        %943 = vperm.xlu0 %942, %v890
        %v944 = vpop.permute.xlu0 %943
        %947 = vset.pattern.permute.xlu0 0
        %948 = vperm.xlu0 %947, %v891
        %v949 = vpop.permute.xlu0 %948
        %952 = vset.pattern.permute.xlu0 0
        %953 = vperm.xlu0 %952, %v892
        %v954 = vpop.permute.xlu0 %953
        %v956 = vlaneseq
        %v957 = vshrl.u32 %v956, 7
        %v958 = vsub.s32 0, %v957
        %v959 = vrot.slane %v908, %v958
        %v960 = vlaneseq
        %v961 = vshrl.u32 %v960, 7
        %v962 = vsub.s32 0, %v961
        %v963 = vrot.slane %v915, %v962
        %v966 = vmul.f32 %v919, %v959
        %v967 = vmul.f32 %v924, %v959
        %v968 = vmul.f32 %v929, %v959
        %v969 = vmul.f32 %v934, %v959
        %v970 = vmul.f32 %v939, %v963
        %v971 = vmul.f32 %v944, %v963
        %v972 = vmul.f32 %v949, %v963
        %v973 = vmul.f32 %v954, %v963
        %982 = vrot.lane.b32.xlu0 %v966, 96
        %v983 = vpop.permute.xlu0 %982
        %984 = vrot.lane.b32.xlu0 %v967, 96
        %v985 = vpop.permute.xlu0 %984
        %986 = vrot.lane.b32.xlu0 %v968, 96
        %v987 = vpop.permute.xlu0 %986
        %988 = vrot.lane.b32.xlu0 %v969, 96
        %v989 = vpop.permute.xlu0 %988
        %990 = vrot.lane.b32.xlu0 %v970, 96
        %v991 = vpop.permute.xlu0 %990
        %992 = vrot.lane.b32.xlu0 %v971, 96
        %v993 = vpop.permute.xlu0 %992
        %994 = vrot.lane.b32.xlu0 %v972, 96
        %v995 = vpop.permute.xlu0 %994
        %996 = vrot.lane.b32.xlu0 %v973, 96
        %v997 = vpop.permute.xlu0 %996
        %v1006 = vadd.f32 %v827, %v983
        %v1007 = vadd.f32 %v828, %v985
        %v1008 = vadd.f32 %v829, %v987
        %v1009 = vadd.f32 %v830, %v989
        %v1010 = vadd.f32 %v831, %v991
        %v1011 = vadd.f32 %v832, %v993
        %v1012 = vadd.f32 %v833, %v995
        %v1013 = vadd.f32 %v834, %v997
        %1014 = vst.msk [vmem:[%s438] sm:$0xff] %vm625, %v1006
        %1015 = vst.msk [vmem:[%s438 + $0x8] sm:$0xff] %vm625, %v1007
        %1016 = vst.msk [vmem:[%s438 + $0x10] sm:$0xff] %vm625, %v1008
        %1017 = vst.msk [vmem:[%s438 + $0x18] sm:$0xff] %vm625, %v1009
        %1018 = vst.msk [vmem:[%s438 + $0x20] sm:$0xff] %vm625, %v1010
        %1019 = vst.msk [vmem:[%s438 + $0x28] sm:$0xff] %vm625, %v1011
        %1020 = vst.msk [vmem:[%s438 + $0x30] sm:$0xff] %vm625, %v1012
        %1021 = vst.msk [vmem:[%s438 + $0x38] sm:$0xff] %vm625, %v1013
        %1022 = vst.msk [vmem:[%s443] sm:$0x3] %vm658, %v678
        %vm1023 = vcmask 1024
        %1024 = vst.msk [vmem:[%s447] sm:$0x3] %vm1023, %v576
        %s1025 = sand.u32 %s194, 1
        %s1026 = scalar_lea.sflag [#allocation3], %s1025
        %s1027 = sand.u32 %s194, 1
        %s1028 = smul.addr %s1027, 2
        %s1029 = scalar_lea.vmem [#allocation2], %s1028
        %s1030 = smul.u32 2, %s28
        %p1031 = scmp.lt.s32.totalorder %s1030, 1
        %s1032 = scalar_select %p1031, %s1030, 1
        %s1033 = smul.addr %s1032, 4
        %s1034 = smul.addr %s1033, 8
        %s1035 = scalar_lea.vmem %s7, %s1034
        %p1036 = scmp.lt.s32.totalorder %s28, 0
        %s1037 = scalar_select %p1036, %s28, 0
        %s1038 = smul.addr %s1037, 2
        %s1039 = scalar_lea.vmem %s8, %s1038
        %p1040 = scmp.lt.s32.totalorder %s28, 0
        %s1041 = scalar_select %p1040, %s28, 0
        %s1042 = smul.addr %s1041, 2
        %s1043 = scalar_lea.vmem %s9, %s1042
        // Predicated region
        $region49: #{tpu_custom_call.1} parent=43 // pred_check
          %p1044 = pneg %p204
        $region50: #{tpu_custom_call.1} parent=43 // pred_check_branch
          %1046 = sbr.rel (%p1044) target = $region52
        $region51: #{tpu_custom_call.1} parent=43 // pred_region
          %s1048 = ssub.s32 32, 32
          %1049 = vsyncadd %s1026, %s1048
          %s1050 = sadd.s32 %s28, %s29
          %s1051 = smul.addr %s1050, 32
          %s1052 = scalar_lea.hbm %s6, %s1051
          %s1054 = sshll.u32 %s1029, 4
          %s1055 = int_to_ptr.vmem [resolvable:$true] %s1054
          %1057 = dma.vmem_to_hbm [thread:$0]  %s1055, 32, %s1052, %s1026
        $region52: #{tpu_custom_call.1} parent=43 // pred_fallthru
          _
        // Predicated region
        $region53: #{tpu_custom_call.1} parent=43 // pred_check
          %p1058 = pneg %p230
        $region54: #{tpu_custom_call.1} parent=43 // pred_check_branch
          %1060 = sbr.rel (%p1058) target = $region56
        $region55: #{tpu_custom_call.1} parent=43 // pred_region
          %s1061 = smul.u32 2, %s28
        $region56: #{tpu_custom_call.1} parent=43 // pred_fallthru
          _
        // Predicated region
        $region57: #{tpu_custom_call.1} parent=43 // pred_check
          %p1062 = pneg %p256
        $region58: #{tpu_custom_call.1} parent=43 // pred_check_branch
          %1064 = sbr.rel (%p1062) target = $region60
        $region59: #{tpu_custom_call.1} parent=43 // pred_region
          _
        $region60: #{tpu_custom_call.1} parent=43 // pred_fallthru
          _
        // Predicated region
        $region61: #{tpu_custom_call.1} parent=43 // pred_check
          %p1065 = pneg %p282
        $region62: #{tpu_custom_call.1} parent=43 // pred_check_branch
          %1067 = sbr.rel (%p1065) target = $region64
        $region63: #{tpu_custom_call.1} parent=43 // pred_region
          _
        $region64: #{tpu_custom_call.1} parent=43 // pred_fallthru
          _
        // Predicated region
        $region65: #{tpu_custom_call.1} parent=43 // pred_check
          %p1068 = pneg %p230
        $region66: #{tpu_custom_call.1} parent=43 // pred_check_branch
          %1070 = sbr.rel (%p1068) target = $region68
        $region67: #{tpu_custom_call.1} parent=43 // pred_region
          %s1071 = smul.u32 2, %s28
          %p1072 = scmp.lt.s32.totalorder %s1071, 1
          %s1073 = scalar_select %p1072, %s1071, 1
          %s1074 = smul.addr %s1073, 4
          %s1075 = smul.addr %s1074, 8
          %s1076 = scalar_lea.vmem %s7, %s1075
        $region68: #{tpu_custom_call.1} parent=43 // pred_fallthru
          _
        // Predicated region
        $region69: #{tpu_custom_call.1} parent=43 // pred_check
          %p1077 = pneg %p256
        $region70: #{tpu_custom_call.1} parent=43 // pred_check_branch
          %1079 = sbr.rel (%p1077) target = $region72
        $region71: #{tpu_custom_call.1} parent=43 // pred_region
          %p1080 = scmp.lt.s32.totalorder %s28, 0
          %s1081 = scalar_select %p1080, %s28, 0
          %s1082 = smul.addr %s1081, 2
          %s1083 = scalar_lea.vmem %s8, %s1082
        $region72: #{tpu_custom_call.1} parent=43 // pred_fallthru
          _
        // Predicated region
        $region73: #{tpu_custom_call.1} parent=43 // pred_check
          %p1084 = pneg %p282
        $region74: #{tpu_custom_call.1} parent=43 // pred_check_branch
          %1086 = sbr.rel (%p1084) target = $region76
        $region75: #{tpu_custom_call.1} parent=43 // pred_region
          %p1087 = scmp.lt.s32.totalorder %s28, 0
          %s1088 = scalar_select %p1087, %s28, 0
          %s1089 = smul.addr %s1088, 2
          %s1090 = scalar_lea.vmem %s9, %s1089
        $region76: #{tpu_custom_call.1} parent=43 // pred_fallthru
          _
      $region44: #{tpu_custom_call.1} parent=5 // pred_fallthru
        _
      %p1091 = scmp.le.s32.totalorder 2, %s19
      // Predicated region
      $region77: #{tpu_custom_call.1} parent=5 // pred_check
        %p1092 = pneg %p1091
      $region78: #{tpu_custom_call.1} parent=5 // pred_check_branch
        %1094 = sbr.rel (%p1092) target = $region80
      $region79: #{tpu_custom_call.1} parent=5 // pred_region
        %s1095 = ssub.s32 %s19, 2
        // Predicated region
        $region81: #{tpu_custom_call.1} parent=79 // pred_check
          %p1096 = pneg %p210
        $region82: #{tpu_custom_call.1} parent=79 // pred_check_branch
          %1098 = sbr.rel (%p1096) target = $region84
        $region83: #{tpu_custom_call.1} parent=79 // pred_region
          %s1099 = sand.u32 %s195, 1
          %s1100 = scalar_lea.sflag [#allocation3], %s1099
          %s1101 = sand.u32 %s195, 1
          %s1102 = smul.addr %s1101, 2
          %s1103 = scalar_lea.vmem [#allocation2], %s1102
          %1104 = dma.done %s1100, 32
        $region84: #{tpu_custom_call.1} parent=79 // pred_fallthru
          _
      $region80: #{tpu_custom_call.1} parent=5 // pred_fallthru
        _
    $region6: #{tpu_custom_call.1} parent=1 // loop_footer
      %s23 = sadd.s32 1, %s19
    $region7: #{tpu_custom_call.1} parent=1 // loop_footer_branch
      %18 = sbr.rel target = $region3
    $region8: #{tpu_custom_call.1} parent=1 // loop_exit
      _
    %1105 = vsyncpa [#allocation3], 1
    %s1106 = scalar_lea.sflag [#allocation3], 1
    %1107 = vsyncpa %s1106, 1

</llo_original>
